<compile_context>
chip_gen: v7x
topology: tpu7x:2x2x1
jax: 0.10.0
libtpu: 0.0.40
codegen_flags: <defaults>
</compile_context>

<pallas_src>
import math

import jax
import jax.numpy as jnp
from jax.experimental import pallas as pl
from jax.experimental.pallas import tpu as pltpu

# ---- hyper-parameters (seqTrans defaults) ----
DIM = 64
NUM_CLASSES = 10
HEADS = 8            # documents the MHA config; heads never mix when seq_len == 1
LN_EPS = 1e-5
OUT_PAD = 128        # lane-dense classifier output width (sliced to NUM_CLASSES)
PE_ROW0 = 8          # row offset of the PE rows inside the packed vector operand


# -------------------------------------------------------------------------
# Single fused kernel: conv matmul + ReLU + mean-pool + PE + folded value-only
# attention + LayerNorm residual + classifier.
# -------------------------------------------------------------------------
def _make_fused_kernel(B, HW):
    def kernel(xcols_ref, wconv_ref, wpack_ref, vpack_ref, o_ref):
        # ---- packed small vectors (one tiny f32 load, static value slices) ----
        vp = vpack_ref[...]                         # (PE_ROW0 + ceil(B), 128)
        bconv = vp[0:1, :DIM]                       # conv bias
        bvo   = vp[1:2, :DIM]                       # folded attention bias
        gamma = vp[2:3, :DIM]                       # LayerNorm weight
        beta  = vp[3:4, :DIM]                       # LayerNorm bias
        bc    = vp[4:5, :]                          # classifier bias (128-wide, padded)
        pe    = vp[PE_ROW0:PE_ROW0 + B, :DIM]       # positional encoding rows 0..B-1

        # ---- Conv2d(3x3, pad=1) + ReLU: one bf16 MXU matmul, f32 accumulate ----
        act = jnp.dot(xcols_ref[...], wconv_ref[...],
                      preferred_element_type=jnp.float32)        # (B*HW, DIM) f32
        act = jnp.maximum(act + bconv, 0.0)

        # ---- AdaptiveAvgPool2d(1): per-image mean over the HW valid rows ----
        feats = jnp.mean(act.reshape(B, HW, DIM), axis=1)        # (B, DIM)

        # ---- PositionalEncoding (dropout = identity) ----
        x = feats + pe
        identity = x

        # ---- MHA with seq_len == 1: softmax == 1, Wv/Wo folded in wrapper ----
        wvo = wpack_ref[:, pl.ds(0, DIM)]                        # (DIM, DIM)
        attn = jnp.dot(x, wvo, preferred_element_type=jnp.float32) + bvo

        # ---- LayerNorm(attn) + identity residual (f32 elementwise) ----
        mu = jnp.mean(attn, axis=-1, keepdims=True)
        var = jnp.mean((attn - mu) ** 2, axis=-1, keepdims=True)
        ln = (attn - mu) * jax.lax.rsqrt(var + LN_EPS) * gamma + beta
        xo = ln + identity

        # ---- x[:, 0] (seq_len == 1) + classifier, lane-dense 128-wide store ----
        wc = wpack_ref[:, pl.ds(OUT_PAD, OUT_PAD)]               # (DIM, 128)
        o_ref[...] = jnp.dot(xo, wc, preferred_element_type=jnp.float32) + bc

    return kernel


# -------------------------------------------------------------------------
# Wrapper: layout prep (im2col, weight folding/packing) + one pallas_call
# -------------------------------------------------------------------------
def seq_trans_forward(img, params):
    """img: (B, C, H, W) float32 NCHW, exactly like the PyTorch module."""
    B, C, H, W = img.shape
    HW = H * W
    K9 = 9 * C

    # --- wrapper-side im2col: only the valid output rows, col = (kh*3+kw)*C + c ---
    x = jnp.transpose(img, (0, 2, 3, 1))                       # (B, H, W, C)
    xp = jnp.pad(x, ((0, 0), (1, 1), (1, 1), (0, 0)))          # (B, H+2, W+2, C)
    cols = jnp.concatenate(
        [xp[:, kh:kh + H, kw:kw + W, :] for kh in range(3) for kw in range(3)],
        axis=-1).reshape(B * HW, K9)
    cols = cols.astype(jnp.bfloat16)                           # MXU-native operand

    # --- Conv2d weight OIHW -> (9*C, DIM); row = (kh*3+kw)*C + c, col = out-chan ---
    wconv = jnp.transpose(params["conv_w"], (2, 3, 1, 0)).reshape(K9, DIM)
    wconv = wconv.astype(jnp.bfloat16)

    # --- fold V-projection and out_proj (exact algebra for seq_len == 1) ---
    Wv = params["in_proj_w"][2 * DIM:3 * DIM, :]               # (E, E) V slice
    bv = params["in_proj_b"][2 * DIM:3 * DIM]
    Wo = params["out_proj_w"]
    bo = params["out_proj_b"]
    wvo = Wv.T @ Wo.T                                          # x @ wvo == (x@Wv^T)@Wo^T
    bvo = bv @ Wo.T + bo

    # --- positional encoding: only the first B rows of the 5000-row table ---
    pos = jnp.arange(B, dtype=jnp.float32)[:, None]
    div = jnp.exp(jnp.arange(0, DIM, 2, dtype=jnp.float32)
                  * (-math.log(10000.0) / DIM))
    pe = jnp.zeros((B, DIM), jnp.float32)
    pe = pe.at[:, 0::2].set(jnp.sin(pos * div))
    pe = pe.at[:, 1::2].set(jnp.cos(pos * div))

    # --- pack weight matrices: cols 0:64 = folded attn, cols 128:256 = classifier ---
    wpack = jnp.zeros((DIM, 2 * OUT_PAD), jnp.float32)
    wpack = wpack.at[:, :DIM].set(wvo)
    wpack = wpack.at[:, OUT_PAD:OUT_PAD + NUM_CLASSES].set(params["cls_w"].T)

    # --- pack all small vectors (biases, LN params, PE) into one lane-dense array ---
    vrows = PE_ROW0 + ((B + 7) // 8) * 8
    vpack = jnp.zeros((vrows, 128), jnp.float32)
    vpack = vpack.at[0, :DIM].set(params["conv_b"])
    vpack = vpack.at[1, :DIM].set(bvo)
    vpack = vpack.at[2, :DIM].set(params["ln_g"])
    vpack = vpack.at[3, :DIM].set(params["ln_b"])
    vpack = vpack.at[4, :NUM_CLASSES].set(params["cls_b"])
    vpack = vpack.at[PE_ROW0:PE_ROW0 + B, :DIM].set(pe)

    vmem = pl.BlockSpec(memory_space=pltpu.MemorySpace.VMEM)
    flops = 2 * B * HW * K9 * DIM + 2 * B * DIM * DIM + 2 * B * DIM * OUT_PAD
    bytes_accessed = (cols.size * 2 + wconv.size * 2
                      + wpack.size * 4 + vpack.size * 4 + B * OUT_PAD * 4)

    out_pad = pl.pallas_call(
        _make_fused_kernel(B, HW),
        out_shape=jax.ShapeDtypeStruct((B, OUT_PAD), jnp.float32),
        in_specs=[vmem] * 4,
        out_specs=vmem,
        cost_estimate=pl.CostEstimate(flops=flops, transcendentals=0,
                                      bytes_accessed=bytes_accessed),
    )(cols, wconv, wpack, vpack)

    # TODO(synk): when B*H*W grows, tile the conv rows over a leading 'parallel'
    # grid axis (so v7x's 2 TensorCores both get work), size blocks against v7x's
    # 64 MiB VMEM / v5e's 16 MiB scoped default with an explicit
    # pltpu.CompilerParams(vmem_limit_bytes=...); at these shapes every operand
    # fits in VMEM and a single grid-less call is fastest.
    return out_pad[:, :NUM_CLASSES]


def init_params(key, in_ch):
    ks = jax.random.split(key, 8)
    fan_in = in_ch * 9
    return {
        # conv_model: Conv2d(in_ch, DIM, 3, pad=1) -> ReLU -> GAP  (kaiming init)
        "conv_w": jax.random.normal(ks[0], (DIM, in_ch, 3, 3), jnp.float32)
                  * math.sqrt(2.0 / fan_in),
        "conv_b": jax.random.normal(ks[1], (DIM,), jnp.float32) * 0.01,
        # MultiheadAttention packed projections (PyTorch layout: (3*E, E))
        "in_proj_w": jax.random.normal(ks[2], (3 * DIM, DIM), jnp.float32)
                     * math.sqrt(1.0 / DIM),
        "in_proj_b": jax.random.normal(ks[3], (3 * DIM,), jnp.float32) * 1e-3,
        "out_proj_w": jax.random.normal(ks[4], (DIM, DIM), jnp.float32)
                      * math.sqrt(1.0 / DIM),
        "out_proj_b": jnp.zeros((DIM,), jnp.float32),
        # LayerNorm (PyTorch defaults)
        "ln_g": jnp.ones((DIM,), jnp.float32),
        "ln_b": jnp.zeros((DIM,), jnp.float32),
        # final classifier Linear(dim, num_classes)
        "cls_w": jax.random.normal(ks[5], (NUM_CLASSES, DIM), jnp.float32)
                 * math.sqrt(2.0 / (DIM + NUM_CLASSES)),
        "cls_b": jax.random.normal(ks[6], (NUM_CLASSES,), jnp.float32) * 1e-6,
    }


if __name__ == "__main__":
    key = jax.random.PRNGKey(0)
    pkey, xkey = jax.random.split(key)

    B, C, H, W = 2, 4, 16, 16
    img = jax.random.normal(xkey, (B, C, H, W), jnp.float32)   # NCHW, like PyTorch
    params = init_params(pkey, C)

    fwd = jax.jit(seq_trans_forward)
    out = fwd(img, params)
    out = jax.block_until_ready(out)
    assert out.shape == (B, NUM_CLASSES) and out.dtype == jnp.float32
    assert bool(jnp.all(jnp.isfinite(out)))
    print("KERNEL_OK")
</pallas_src>

<mosaic_0001>
module attributes {stable_mosaic.version = 11 : i64} {
  func.func @kernel(%arg0: memref<512x36xbf16, #tpu.memory_space<vmem>>, %arg1: memref<36x64xbf16, #tpu.memory_space<vmem>>, %arg2: memref<64x256xf32, #tpu.memory_space<vmem>>, %arg3: memref<16x128xf32, #tpu.memory_space<vmem>>, %arg4: memref<2x128xf32, #tpu.memory_space<vmem>>) attributes {dimension_semantics = [], scalar_prefetch = 0 : i64, scratch_operands = 0 : i64, tpu.core_type = #tpu.core_type<tc>} {
    %c0 = arith.constant 0 : index
    %c0_0 = arith.constant 0 : index
    %0 = vector.load %arg3[%c0, %c0_0] : memref<16x128xf32, #tpu.memory_space<vmem>>, vector<16x128xf32>
    %1 = vector.extract_strided_slice %0 {offsets = [0, 0], sizes = [1, 64], strides = [1, 1]} : vector<16x128xf32> to vector<1x64xf32>
    %2 = vector.extract_strided_slice %0 {offsets = [1, 0], sizes = [1, 64], strides = [1, 1]} : vector<16x128xf32> to vector<1x64xf32>
    %3 = vector.extract_strided_slice %0 {offsets = [2, 0], sizes = [1, 64], strides = [1, 1]} : vector<16x128xf32> to vector<1x64xf32>
    %4 = vector.extract_strided_slice %0 {offsets = [3, 0], sizes = [1, 64], strides = [1, 1]} : vector<16x128xf32> to vector<1x64xf32>
    %5 = vector.extract_strided_slice %0 {offsets = [4, 0], sizes = [1, 128], strides = [1, 1]} : vector<16x128xf32> to vector<1x128xf32>
    %6 = vector.extract_strided_slice %0 {offsets = [8, 0], sizes = [2, 64], strides = [1, 1]} : vector<16x128xf32> to vector<2x64xf32>
    %c0_1 = arith.constant 0 : index
    %c0_2 = arith.constant 0 : index
    %7 = vector.load %arg0[%c0_1, %c0_2] : memref<512x36xbf16, #tpu.memory_space<vmem>>, vector<512x36xbf16>
    %c0_3 = arith.constant 0 : index
    %c0_4 = arith.constant 0 : index
    %8 = vector.load %arg1[%c0_3, %c0_4] : memref<36x64xbf16, #tpu.memory_space<vmem>>, vector<36x64xbf16>
    %cst = arith.constant dense<0.000000e+00> : vector<512x64xf32>
    %9 = tpu.matmul %7, %8, %cst {dimension_numbers = #tpu.dot_dimension_numbers<[1], [0], [0], [1], [0, 0, 1, 1], [], []>} : vector<512x36xbf16>, vector<36x64xbf16>, vector<512x64xf32> -> vector<512x64xf32>
    %10 = vector.broadcast %1 : vector<1x64xf32> to vector<512x64xf32>
    %11 = arith.addf %9, %10 : vector<512x64xf32>
    %cst_5 = arith.constant 0.000000e+00 : f32
    %12 = vector.broadcast %cst_5 : f32 to vector<512x64xf32>
    %13 = arith.maximumf %11, %12 : vector<512x64xf32>
    %14 = vector.shape_cast %13 : vector<512x64xf32> to vector<2x256x64xf32>
    %cst_6 = arith.constant dense<0.000000e+00> : vector<2x64xf32>
    %15 = vector.multi_reduction <add>, %14, %cst_6 [1] : vector<2x256x64xf32> to vector<2x64xf32>
    %cst_7 = arith.constant 2.560000e+02 : f32
    %16 = vector.broadcast %cst_7 : f32 to vector<2x64xf32>
    %17 = arith.divf %15, %16 : vector<2x64xf32>
    %18 = arith.addf %17, %6 : vector<2x64xf32>
    %c0_8 = arith.constant 0 : index
    %c0_9 = arith.constant 0 : index
    %19 = vector.load %arg2[%c0_8, %c0_9] : memref<64x256xf32, #tpu.memory_space<vmem>>, vector<64x64xf32>
    %cst_10 = arith.constant dense<0.000000e+00> : vector<2x64xf32>
    %20 = tpu.matmul %18, %19, %cst_10 {dimension_numbers = #tpu.dot_dimension_numbers<[1], [0], [0], [1], [0, 0, 1, 1], [], []>} : vector<2x64xf32>, vector<64x64xf32>, vector<2x64xf32> -> vector<2x64xf32>
    %21 = vector.broadcast %2 : vector<1x64xf32> to vector<2x64xf32>
    %22 = arith.addf %20, %21 : vector<2x64xf32>
    %cst_11 = arith.constant dense<0.000000e+00> : vector<2xf32>
    %23 = vector.multi_reduction <add>, %22, %cst_11 [1] : vector<2x64xf32> to vector<2xf32>
    %24 = vector.shape_cast %23 : vector<2xf32> to vector<2x1xf32>
    %cst_12 = arith.constant 6.400000e+01 : f32
    %25 = vector.broadcast %cst_12 : f32 to vector<2x1xf32>
    %26 = arith.divf %24, %25 : vector<2x1xf32>
    %27 = vector.broadcast %26 : vector<2x1xf32> to vector<2x64xf32>
    %28 = arith.subf %22, %27 : vector<2x64xf32>
    %29 = arith.mulf %28, %28 : vector<2x64xf32>
    %cst_13 = arith.constant dense<0.000000e+00> : vector<2xf32>
    %30 = vector.multi_reduction <add>, %29, %cst_13 [1] : vector<2x64xf32> to vector<2xf32>
    %31 = vector.shape_cast %30 : vector<2xf32> to vector<2x1xf32>
    %cst_14 = arith.constant 6.400000e+01 : f32
    %32 = vector.broadcast %cst_14 : f32 to vector<2x1xf32>
    %33 = arith.divf %31, %32 : vector<2x1xf32>
    %34 = vector.broadcast %26 : vector<2x1xf32> to vector<2x64xf32>
    %35 = arith.subf %22, %34 : vector<2x64xf32>
    %cst_15 = arith.constant 9.99999974E-6 : f32
    %36 = vector.broadcast %cst_15 : f32 to vector<2x1xf32>
    %37 = arith.addf %33, %36 : vector<2x1xf32>
    %38 = math.rsqrt %37 : vector<2x1xf32>
    %39 = vector.broadcast %38 : vector<2x1xf32> to vector<2x64xf32>
    %40 = arith.mulf %35, %39 : vector<2x64xf32>
    %41 = vector.broadcast %3 : vector<1x64xf32> to vector<2x64xf32>
    %42 = arith.mulf %40, %41 : vector<2x64xf32>
    %43 = vector.broadcast %4 : vector<1x64xf32> to vector<2x64xf32>
    %44 = arith.addf %42, %43 : vector<2x64xf32>
    %45 = arith.addf %44, %18 : vector<2x64xf32>
    %c0_16 = arith.constant 0 : index
    %c128 = arith.constant 128 : index
    %46 = vector.load %arg2[%c0_16, %c128] : memref<64x256xf32, #tpu.memory_space<vmem>>, vector<64x128xf32>
    %cst_17 = arith.constant dense<0.000000e+00> : vector<2x128xf32>
    %47 = tpu.matmul %45, %46, %cst_17 {dimension_numbers = #tpu.dot_dimension_numbers<[1], [0], [0], [1], [0, 0, 1, 1], [], []>} : vector<2x64xf32>, vector<64x128xf32>, vector<2x128xf32> -> vector<2x128xf32>
    %48 = vector.broadcast %5 : vector<1x128xf32> to vector<2x128xf32>
    %49 = arith.addf %47, %48 : vector<2x128xf32>
    %c0_18 = arith.constant 0 : index
    %c0_19 = arith.constant 0 : index
    %50 = vector.load %arg4[%c0_18, %c0_19] : memref<2x128xf32, #tpu.memory_space<vmem>>, vector<2x128xf32>
    tpu.vector_store %arg4[%c0_18, %c0_19], %49 {strides = array<i32>} : memref<2x128xf32, #tpu.memory_space<vmem>>, vector<2x128xf32>,
    return
  }
}

</mosaic_0001>

<llo_original>
// kernel: seq_trans_forward.1
$region0: #{seq_trans_forward.1}
  #allocation0 [shape = 'u32[]', space=smem, size = 0x4, offset = 0x4, fixed_abs, tag = 'smem constant byte address 0x4 - core index']
  #allocation1 [shape = 'u32[144,128]{1,0:T(1,128)}', space=vmem, size = 0x12000, scoped, tag = 'internal scratch']
  %s0 = inlined_call_operand.vmem [shape: bf16[512,36], index: 0, kind: input, shape index: {}]
  %s1 = inlined_call_operand.vmem [shape: bf16[36,64], index: 1, kind: input, shape index: {}]
  %s2 = inlined_call_operand.vmem [shape: f32[64,256], index: 2, kind: input, shape index: {}]
  %s3 = inlined_call_operand.vmem [shape: f32[16,128], index: 3, kind: input, shape index: {}]
  %s4 = inlined_call_operand.hbm [shape: f32[2,128], index: 4, kind: output, shape index: {}]
  %s5 = sld [smem:[#allocation0]]
  $region26: #{seq_trans_forward.1} parent=0
    _
  %s7 = ssub.s32 1, %s5
  %s8 = scalar_select 0, %s7, %s5
  $region1: #{seq_trans_forward.1} parent=0
    #allocation2 [shape = 'u8[1024]{0}', space=vmem, size = 0x400, scoped, tag = 'output window, operand 0, single buffered']
    #allocation3 [shape = 's32[1]{0}', space=sflag, size = 0x4, scoped, tag = 'scoped memory for seq_trans_forward.1']
    %9 = vsyncpa [#allocation3], 0
    // Predicated region
    $region2: #{seq_trans_forward.1} parent=1 // pred_check
      _
    $region3: #{seq_trans_forward.1} parent=1 // pred_check_branch
      %11 = sbr.rel (0) target = $region5
    $region4: #{seq_trans_forward.1} parent=1 // pred_region
      _
    $region5: #{seq_trans_forward.1} parent=1 // pred_fallthru
      _
    // Predicated region
    $region6: #{seq_trans_forward.1} parent=1 // pred_check
      _
    $region7: #{seq_trans_forward.1} parent=1 // pred_check_branch
      %13 = sbr.rel (0) target = $region9
    $region8: #{seq_trans_forward.1} parent=1 // pred_region
      _
    $region9: #{seq_trans_forward.1} parent=1 // pred_fallthru
      _
    // Predicated region
    $region10: #{seq_trans_forward.1} parent=1 // pred_check
      _
    $region11: #{seq_trans_forward.1} parent=1 // pred_check_branch
      %15 = sbr.rel (0) target = $region13
    $region12: #{seq_trans_forward.1} parent=1 // pred_region
      _
    $region13: #{seq_trans_forward.1} parent=1 // pred_fallthru
      _
    // Predicated region
    $region14: #{seq_trans_forward.1} parent=1 // pred_check
      _
    $region15: #{seq_trans_forward.1} parent=1 // pred_check_branch
      %17 = sbr.rel (0) target = $region17
    $region16: #{seq_trans_forward.1} parent=1 // pred_region
      _
    $region17: #{seq_trans_forward.1} parent=1 // pred_fallthru
      _
    %v19 = vld [vmem:[%s3] sm:$0xff]
    %v20 = vld [vmem:[%s3 + $0x8] sm:$0xff]
    %v21 = vld [vmem:[%s0] sm:$0xf]
    %v22 = vld [vmem:[%s0 + $0x4] sm:$0xf]
    %v23 = vld [vmem:[%s0 + $0x8] sm:$0xf]
    %v24 = vld [vmem:[%s0 + $0xc] sm:$0xf]
    %v25 = vld [vmem:[%s0 + $0x10] sm:$0xf]
    %v26 = vld [vmem:[%s0 + $0x14] sm:$0xf]
    %v27 = vld [vmem:[%s0 + $0x18] sm:$0xf]
    %v28 = vld [vmem:[%s0 + $0x1c] sm:$0xf]
    %v29 = vld [vmem:[%s0 + $0x20] sm:$0xf]
    %v30 = vld [vmem:[%s0 + $0x24] sm:$0xf]
    %v31 = vld [vmem:[%s0 + $0x28] sm:$0xf]
    %v32 = vld [vmem:[%s0 + $0x2c] sm:$0xf]
    %v33 = vld [vmem:[%s0 + $0x30] sm:$0xf]
    %v34 = vld [vmem:[%s0 + $0x34] sm:$0xf]
    %v35 = vld [vmem:[%s0 + $0x38] sm:$0xf]
    %v36 = vld [vmem:[%s0 + $0x3c] sm:$0xf]
    %v37 = vld [vmem:[%s0 + $0x40] sm:$0xf]
    %v38 = vld [vmem:[%s0 + $0x44] sm:$0xf]
    %v39 = vld [vmem:[%s0 + $0x48] sm:$0xf]
    %v40 = vld [vmem:[%s0 + $0x4c] sm:$0xf]
    %v41 = vld [vmem:[%s0 + $0x50] sm:$0xf]
    %v42 = vld [vmem:[%s0 + $0x54] sm:$0xf]
    %v43 = vld [vmem:[%s0 + $0x58] sm:$0xf]
    %v44 = vld [vmem:[%s0 + $0x5c] sm:$0xf]
    %v45 = vld [vmem:[%s0 + $0x60] sm:$0xf]
    %v46 = vld [vmem:[%s0 + $0x64] sm:$0xf]
    %v47 = vld [vmem:[%s0 + $0x68] sm:$0xf]
    %v48 = vld [vmem:[%s0 + $0x6c] sm:$0xf]
    %v49 = vld [vmem:[%s0 + $0x70] sm:$0xf]
    %v50 = vld [vmem:[%s0 + $0x74] sm:$0xf]
    %v51 = vld [vmem:[%s0 + $0x78] sm:$0xf]
    %v52 = vld [vmem:[%s0 + $0x7c] sm:$0xf]
    %v53 = vld [vmem:[%s0 + $0x80] sm:$0xf]
    %v54 = vld [vmem:[%s0 + $0x84] sm:$0xf]
    %v55 = vld [vmem:[%s0 + $0x88] sm:$0xf]
    %v56 = vld [vmem:[%s0 + $0x8c] sm:$0xf]
    %v57 = vld [vmem:[%s0 + $0x90] sm:$0xf]
    %v58 = vld [vmem:[%s0 + $0x94] sm:$0xf]
    %v59 = vld [vmem:[%s0 + $0x98] sm:$0xf]
    %v60 = vld [vmem:[%s0 + $0x9c] sm:$0xf]
    %v61 = vld [vmem:[%s0 + $0xa0] sm:$0xf]
    %v62 = vld [vmem:[%s0 + $0xa4] sm:$0xf]
    %v63 = vld [vmem:[%s0 + $0xa8] sm:$0xf]
    %v64 = vld [vmem:[%s0 + $0xac] sm:$0xf]
    %v65 = vld [vmem:[%s0 + $0xb0] sm:$0xf]
    %v66 = vld [vmem:[%s0 + $0xb4] sm:$0xf]
    %v67 = vld [vmem:[%s0 + $0xb8] sm:$0xf]
    %v68 = vld [vmem:[%s0 + $0xbc] sm:$0xf]
    %v69 = vld [vmem:[%s0 + $0xc0] sm:$0xf]
    %v70 = vld [vmem:[%s0 + $0xc4] sm:$0xf]
    %v71 = vld [vmem:[%s0 + $0xc8] sm:$0xf]
    %v72 = vld [vmem:[%s0 + $0xcc] sm:$0xf]
    %v73 = vld [vmem:[%s0 + $0xd0] sm:$0xf]
    %v74 = vld [vmem:[%s0 + $0xd4] sm:$0xf]
    %v75 = vld [vmem:[%s0 + $0xd8] sm:$0xf]
    %v76 = vld [vmem:[%s0 + $0xdc] sm:$0xf]
    %v77 = vld [vmem:[%s0 + $0xe0] sm:$0xf]
    %v78 = vld [vmem:[%s0 + $0xe4] sm:$0xf]
    %v79 = vld [vmem:[%s0 + $0xe8] sm:$0xf]
    %v80 = vld [vmem:[%s0 + $0xec] sm:$0xf]
    %v81 = vld [vmem:[%s0 + $0xf0] sm:$0xf]
    %v82 = vld [vmem:[%s0 + $0xf4] sm:$0xf]
    %v83 = vld [vmem:[%s0 + $0xf8] sm:$0xf]
    %v84 = vld [vmem:[%s0 + $0xfc] sm:$0xf]
    %v85 = vld [vmem:[%s1] sm:$0xf]
    %v86 = vld [vmem:[%s1 + $0x4] sm:$0xf]
    %v87 = vld [vmem:[%s1 + $0x8] sm:$0xf]
    %v88 = vld [vmem:[%s1 + $0xc] sm:$0xf]
    %v89 = vld [vmem:[%s1 + $0x10] sm:$0x3]
    %v90 = vlaneseq
    %v91 = vshrl.u32 %v90, 7
    %v92 = vsub.s32 0, %v91
    %v93 = vrot.slane %v19, %v92
    %v158 = vunpack.c.l.b16 %v21
    %v159 = vunpack.c.l.b16 %v22
    %v160 = vunpack.c.l.b16 %v23
    %v161 = vunpack.c.l.b16 %v24
    %v162 = vunpack.c.l.b16 %v25
    %v163 = vunpack.c.l.b16 %v26
    %v164 = vunpack.c.l.b16 %v27
    %v165 = vunpack.c.l.b16 %v28
    %v166 = vunpack.c.l.b16 %v29
    %v167 = vunpack.c.l.b16 %v30
    %v168 = vunpack.c.l.b16 %v31
    %v169 = vunpack.c.l.b16 %v32
    %v170 = vunpack.c.l.b16 %v33
    %v171 = vunpack.c.l.b16 %v34
    %v172 = vunpack.c.l.b16 %v35
    %v173 = vunpack.c.l.b16 %v36
    %v174 = vunpack.c.l.b16 %v37
    %v175 = vunpack.c.l.b16 %v38
    %v176 = vunpack.c.l.b16 %v39
    %v177 = vunpack.c.l.b16 %v40
    %v178 = vunpack.c.l.b16 %v41
    %v179 = vunpack.c.l.b16 %v42
    %v180 = vunpack.c.l.b16 %v43
    %v181 = vunpack.c.l.b16 %v44
    %v182 = vunpack.c.l.b16 %v45
    %v183 = vunpack.c.l.b16 %v46
    %v184 = vunpack.c.l.b16 %v47
    %v185 = vunpack.c.l.b16 %v48
    %v186 = vunpack.c.l.b16 %v49
    %v187 = vunpack.c.l.b16 %v50
    %v188 = vunpack.c.l.b16 %v51
    %v189 = vunpack.c.l.b16 %v52
    %v190 = vunpack.c.l.b16 %v53
    %v191 = vunpack.c.l.b16 %v54
    %v192 = vunpack.c.l.b16 %v55
    %v193 = vunpack.c.l.b16 %v56
    %v194 = vunpack.c.l.b16 %v57
    %v195 = vunpack.c.l.b16 %v58
    %v196 = vunpack.c.l.b16 %v59
    %v197 = vunpack.c.l.b16 %v60
    %v198 = vunpack.c.l.b16 %v61
    %v199 = vunpack.c.l.b16 %v62
    %v200 = vunpack.c.l.b16 %v63
    %v201 = vunpack.c.l.b16 %v64
    %v202 = vunpack.c.l.b16 %v65
    %v203 = vunpack.c.l.b16 %v66
    %v204 = vunpack.c.l.b16 %v67
    %v205 = vunpack.c.l.b16 %v68
    %v206 = vunpack.c.l.b16 %v69
    %v207 = vunpack.c.l.b16 %v70
    %v208 = vunpack.c.l.b16 %v71
    %v209 = vunpack.c.l.b16 %v72
    %v210 = vunpack.c.l.b16 %v73
    %v211 = vunpack.c.l.b16 %v74
    %v212 = vunpack.c.l.b16 %v75
    %v213 = vunpack.c.l.b16 %v76
    %v214 = vunpack.c.l.b16 %v77
    %v215 = vunpack.c.l.b16 %v78
    %v216 = vunpack.c.l.b16 %v79
    %v217 = vunpack.c.l.b16 %v80
    %v218 = vunpack.c.l.b16 %v81
    %v219 = vunpack.c.l.b16 %v82
    %v220 = vunpack.c.l.b16 %v83
    %v221 = vunpack.c.l.b16 %v84
    %v222 = vpack.c.b16 %v159, %v158
    %v223 = vpack.c.b16 %v161, %v160
    %v224 = vpack.c.b16 %v163, %v162
    %v225 = vpack.c.b16 %v165, %v164
    %v226 = vpack.c.b16 %v167, %v166
    %v227 = vpack.c.b16 %v169, %v168
    %v228 = vpack.c.b16 %v171, %v170
    %v229 = vpack.c.b16 %v173, %v172
    %v230 = vpack.c.b16 %v175, %v174
    %v231 = vpack.c.b16 %v177, %v176
    %v232 = vpack.c.b16 %v179, %v178
    %v233 = vpack.c.b16 %v181, %v180
    %v234 = vpack.c.b16 %v183, %v182
    %v235 = vpack.c.b16 %v185, %v184
    %v236 = vpack.c.b16 %v187, %v186
    %v237 = vpack.c.b16 %v189, %v188
    %v238 = vpack.c.b16 %v191, %v190
    %v239 = vpack.c.b16 %v193, %v192
    %v240 = vpack.c.b16 %v195, %v194
    %v241 = vpack.c.b16 %v197, %v196
    %v242 = vpack.c.b16 %v199, %v198
    %v243 = vpack.c.b16 %v201, %v200
    %v244 = vpack.c.b16 %v203, %v202
    %v245 = vpack.c.b16 %v205, %v204
    %v246 = vpack.c.b16 %v207, %v206
    %v247 = vpack.c.b16 %v209, %v208
    %v248 = vpack.c.b16 %v211, %v210
    %v249 = vpack.c.b16 %v213, %v212
    %v250 = vpack.c.b16 %v215, %v214
    %v251 = vpack.c.b16 %v217, %v216
    %v252 = vpack.c.b16 %v219, %v218
    %v253 = vpack.c.b16 %v221, %v220
    %v259 = vunpack.c.l.b16 %v85
    %v260 = vunpack.c.l.b16 %v86
    %v261 = vunpack.c.l.b16 %v87
    %v262 = vunpack.c.l.b16 %v88
    %v263 = vunpack.c.l.b16 %v89
    %v264 = vpack.c.b16 %v260, %v259
    %v265 = vpack.c.b16 %v262, %v261
    %v266 = vpack.c.b16 %v263, %v263
    %vm269 = vcmask 293888
    %v271 = vsel %vm269, %v222, 0
    %v274 = vsel %vm269, %v223, 0
    %v277 = vsel %vm269, %v224, 0
    %v280 = vsel %vm269, %v225, 0
    %v283 = vsel %vm269, %v226, 0
    %v286 = vsel %vm269, %v227, 0
    %v289 = vsel %vm269, %v228, 0
    %v292 = vsel %vm269, %v229, 0
    %v295 = vsel %vm269, %v230, 0
    %v298 = vsel %vm269, %v231, 0
    %v301 = vsel %vm269, %v232, 0
    %v304 = vsel %vm269, %v233, 0
    %v307 = vsel %vm269, %v234, 0
    %v310 = vsel %vm269, %v235, 0
    %v313 = vsel %vm269, %v236, 0
    %v316 = vsel %vm269, %v237, 0
    %v319 = vsel %vm269, %v238, 0
    %v322 = vsel %vm269, %v239, 0
    %v325 = vsel %vm269, %v240, 0
    %v328 = vsel %vm269, %v241, 0
    %v331 = vsel %vm269, %v242, 0
    %v334 = vsel %vm269, %v243, 0
    %v337 = vsel %vm269, %v244, 0
    %v340 = vsel %vm269, %v245, 0
    %v343 = vsel %vm269, %v246, 0
    %v346 = vsel %vm269, %v247, 0
    %v349 = vsel %vm269, %v248, 0
    %v352 = vsel %vm269, %v249, 0
    %v355 = vsel %vm269, %v250, 0
    %v358 = vsel %vm269, %v251, 0
    %v361 = vsel %vm269, %v252, 0
    %v364 = vsel %vm269, %v253, 0
    %vm366 = vcmask 1041408
    %v368 = vsel %vm366, %v266, 0
    %370 = vmatprep.subr.bf16.mxu0 0
    %371 = vmatpush1.bf16.msra.mxu0 %v264
    %372 = vmatprep.subr.bf16.mxu0 0
    %373 = vmatpush1.bf16.msra.mxu0 %v265
    %374 = vmatprep.subr.bf16.mxu0 0
    %375 = vmatpush1.bf16.msra.mxu0 %v368
    %376 = vmatprep.subr.bf16.mxu0 0
    %377 = vmatpush1.bf16.msra.mxu0 0
    %378 = vmatprep.subr.bf16.mxu0 0
    %379 = vmatpush1.bf16.msra.mxu0 0
    %380 = vmatprep.subr.bf16.mxu0 0
    %381 = vmatpush1.bf16.msra.mxu0 0
    %382 = vmatprep.subr.bf16.mxu0 0
    %383 = vmatpush1.bf16.msra.mxu0 0
    %384 = vmatprep.subr.bf16.mxu0 0
    %385 = vmatpush1.bf16.msra.mxu0 0
    %386 = vmatprep.subr.bf16.mxu0 0
    %387 = vmatpush1.bf16.msra.mxu0 0
    %388 = vmatprep.subr.bf16.mxu0 0
    %389 = vmatpush1.bf16.msra.mxu0 0
    %390 = vmatprep.subr.bf16.mxu0 0
    %391 = vmatpush1.bf16.msra.mxu0 0
    %392 = vmatprep.subr.bf16.mxu0 0
    %393 = vmatpush1.bf16.msra.mxu0 0
    %394 = vmatprep.subr.bf16.mxu0 0
    %395 = vmatpush1.bf16.msra.mxu0 0
    %396 = vmatprep.subr.bf16.mxu0 0
    %397 = vmatpush1.bf16.msra.mxu0 0
    %398 = vmatprep.subr.bf16.mxu0 0
    %399 = vmatpush1.bf16.msra.mxu0 0
    %400 = vmatprep.subr.bf16.mxu0 0
    %401 = vmatpush1.bf16.msra.mxu0 0
    %402 = vmatprep.mubr.bf16.mxu0 0
    %403 = vmatmul.mubr.bf16.gmra.mrb[0].mxu0 %v271
    %v404 = vpop.f32.mrb[0].mxu0
    %v405 = vadd.f32 %v93, %v404
    %v406 = vpop.f32.mrb[0].mxu0
    %v407 = vpop.f32.mrb[0].mxu0
    %v408 = vadd.f32 %v93, %v407
    %v409 = vpop.f32.mrb[0].mxu0
    %410 = vmatprep.mubr.bf16.mxu0 0
    %411 = vmatmul.mubr.bf16.gmra.mrb[0].mxu0 %v274
    %v412 = vpop.f32.mrb[0].mxu0
    %v413 = vadd.f32 %v93, %v412
    %v414 = vpop.f32.mrb[0].mxu0
    %v415 = vpop.f32.mrb[0].mxu0
    %v416 = vadd.f32 %v93, %v415
    %v417 = vpop.f32.mrb[0].mxu0
    %418 = vmatprep.mubr.bf16.mxu0 0
    %419 = vmatmul.mubr.bf16.gmra.mrb[0].mxu0 %v277
    %v420 = vpop.f32.mrb[0].mxu0
    %v421 = vadd.f32 %v93, %v420
    %v422 = vpop.f32.mrb[0].mxu0
    %v423 = vpop.f32.mrb[0].mxu0
    %v424 = vadd.f32 %v93, %v423
    %v425 = vpop.f32.mrb[0].mxu0
    %426 = vmatprep.mubr.bf16.mxu0 0
    %427 = vmatmul.mubr.bf16.gmra.mrb[0].mxu0 %v280
    %v428 = vpop.f32.mrb[0].mxu0
    %v429 = vadd.f32 %v93, %v428
    %v430 = vpop.f32.mrb[0].mxu0
    %v431 = vpop.f32.mrb[0].mxu0
    %v432 = vadd.f32 %v93, %v431
    %v433 = vpop.f32.mrb[0].mxu0
    %434 = vmatprep.mubr.bf16.mxu0 0
    %435 = vmatmul.mubr.bf16.gmra.mrb[0].mxu0 %v283
    %v436 = vpop.f32.mrb[0].mxu0
    %v437 = vadd.f32 %v93, %v436
    %v438 = vpop.f32.mrb[0].mxu0
    %v439 = vpop.f32.mrb[0].mxu0
    %v440 = vadd.f32 %v93, %v439
    %v441 = vpop.f32.mrb[0].mxu0
    %442 = vmatprep.mubr.bf16.mxu0 0
    %443 = vmatmul.mubr.bf16.gmra.mrb[0].mxu0 %v286
    %v444 = vpop.f32.mrb[0].mxu0
    %v445 = vadd.f32 %v93, %v444
    %v446 = vpop.f32.mrb[0].mxu0
    %v447 = vpop.f32.mrb[0].mxu0
    %v448 = vadd.f32 %v93, %v447
    %v449 = vpop.f32.mrb[0].mxu0
    %450 = vmatprep.mubr.bf16.mxu0 0
    %451 = vmatmul.mubr.bf16.gmra.mrb[0].mxu0 %v289
    %v452 = vpop.f32.mrb[0].mxu0
    %v453 = vadd.f32 %v93, %v452
    %v454 = vpop.f32.mrb[0].mxu0
    %v455 = vpop.f32.mrb[0].mxu0
    %v456 = vadd.f32 %v93, %v455
    %v457 = vpop.f32.mrb[0].mxu0
    %458 = vmatprep.mubr.bf16.mxu0 0
    %459 = vmatmul.mubr.bf16.gmra.mrb[0].mxu0 %v292
    %v460 = vpop.f32.mrb[0].mxu0
    %v461 = vadd.f32 %v93, %v460
    %v462 = vpop.f32.mrb[0].mxu0
    %v463 = vpop.f32.mrb[0].mxu0
    %v464 = vadd.f32 %v93, %v463
    %v465 = vpop.f32.mrb[0].mxu0
    %466 = vmatprep.mubr.bf16.mxu0 0
    %467 = vmatmul.mubr.bf16.gmra.mrb[0].mxu0 %v295
    %v468 = vpop.f32.mrb[0].mxu0
    %v469 = vadd.f32 %v93, %v468
    %v470 = vpop.f32.mrb[0].mxu0
    %v471 = vpop.f32.mrb[0].mxu0
    %v472 = vadd.f32 %v93, %v471
    %v473 = vpop.f32.mrb[0].mxu0
    %474 = vmatprep.mubr.bf16.mxu0 0
    %475 = vmatmul.mubr.bf16.gmra.mrb[0].mxu0 %v298
    %v476 = vpop.f32.mrb[0].mxu0
    %v477 = vadd.f32 %v93, %v476
    %v478 = vpop.f32.mrb[0].mxu0
    %v479 = vpop.f32.mrb[0].mxu0
    %v480 = vadd.f32 %v93, %v479
    %v481 = vpop.f32.mrb[0].mxu0
    %482 = vmatprep.mubr.bf16.mxu0 0
    %483 = vmatmul.mubr.bf16.gmra.mrb[0].mxu0 %v301
    %v484 = vpop.f32.mrb[0].mxu0
    %v485 = vadd.f32 %v93, %v484
    %v486 = vpop.f32.mrb[0].mxu0
    %v487 = vpop.f32.mrb[0].mxu0
    %v488 = vadd.f32 %v93, %v487
    %v489 = vpop.f32.mrb[0].mxu0
    %490 = vmatprep.mubr.bf16.mxu0 0
    %491 = vmatmul.mubr.bf16.gmra.mrb[0].mxu0 %v304
    %v492 = vpop.f32.mrb[0].mxu0
    %v493 = vadd.f32 %v93, %v492
    %v494 = vpop.f32.mrb[0].mxu0
    %v495 = vpop.f32.mrb[0].mxu0
    %v496 = vadd.f32 %v93, %v495
    %v497 = vpop.f32.mrb[0].mxu0
    %498 = vmatprep.mubr.bf16.mxu0 0
    %499 = vmatmul.mubr.bf16.gmra.mrb[0].mxu0 %v307
    %v500 = vpop.f32.mrb[0].mxu0
    %v501 = vadd.f32 %v93, %v500
    %v502 = vpop.f32.mrb[0].mxu0
    %v503 = vpop.f32.mrb[0].mxu0
    %v504 = vadd.f32 %v93, %v503
    %v505 = vpop.f32.mrb[0].mxu0
    %506 = vmatprep.mubr.bf16.mxu0 0
    %507 = vmatmul.mubr.bf16.gmra.mrb[0].mxu0 %v310
    %v508 = vpop.f32.mrb[0].mxu0
    %v509 = vadd.f32 %v93, %v508
    %v510 = vpop.f32.mrb[0].mxu0
    %v511 = vpop.f32.mrb[0].mxu0
    %v512 = vadd.f32 %v93, %v511
    %v513 = vpop.f32.mrb[0].mxu0
    %514 = vmatprep.mubr.bf16.mxu0 0
    %515 = vmatmul.mubr.bf16.gmra.mrb[0].mxu0 %v313
    %v516 = vpop.f32.mrb[0].mxu0
    %v517 = vadd.f32 %v93, %v516
    %v518 = vpop.f32.mrb[0].mxu0
    %v519 = vpop.f32.mrb[0].mxu0
    %v520 = vadd.f32 %v93, %v519
    %v521 = vpop.f32.mrb[0].mxu0
    %522 = vmatprep.mubr.bf16.mxu0 0
    %523 = vmatmul.mubr.bf16.gmra.mrb[0].mxu0 %v316
    %v524 = vpop.f32.mrb[0].mxu0
    %v525 = vadd.f32 %v93, %v524
    %v526 = vpop.f32.mrb[0].mxu0
    %v527 = vpop.f32.mrb[0].mxu0
    %v528 = vadd.f32 %v93, %v527
    %v529 = vpop.f32.mrb[0].mxu0
    %530 = vmatprep.mubr.bf16.mxu0 0
    %531 = vmatmul.mubr.bf16.gmra.mrb[0].mxu0 %v319
    %v532 = vpop.f32.mrb[0].mxu0
    %v533 = vadd.f32 %v93, %v532
    %v534 = vpop.f32.mrb[0].mxu0
    %v535 = vpop.f32.mrb[0].mxu0
    %v536 = vadd.f32 %v93, %v535
    %v537 = vpop.f32.mrb[0].mxu0
    %538 = vmatprep.mubr.bf16.mxu0 0
    %539 = vmatmul.mubr.bf16.gmra.mrb[0].mxu0 %v322
    %v540 = vpop.f32.mrb[0].mxu0
    %v541 = vadd.f32 %v93, %v540
    %v542 = vpop.f32.mrb[0].mxu0
    %v543 = vpop.f32.mrb[0].mxu0
    %v544 = vadd.f32 %v93, %v543
    %v545 = vpop.f32.mrb[0].mxu0
    %546 = vmatprep.mubr.bf16.mxu0 0
    %547 = vmatmul.mubr.bf16.gmra.mrb[0].mxu0 %v325
    %v548 = vpop.f32.mrb[0].mxu0
    %v549 = vadd.f32 %v93, %v548
    %v550 = vpop.f32.mrb[0].mxu0
    %v551 = vpop.f32.mrb[0].mxu0
    %v552 = vadd.f32 %v93, %v551
    %v553 = vpop.f32.mrb[0].mxu0
    %554 = vmatprep.mubr.bf16.mxu0 0
    %555 = vmatmul.mubr.bf16.gmra.mrb[0].mxu0 %v328
    %v556 = vpop.f32.mrb[0].mxu0
    %v557 = vadd.f32 %v93, %v556
    %v558 = vpop.f32.mrb[0].mxu0
    %v559 = vpop.f32.mrb[0].mxu0
    %v560 = vadd.f32 %v93, %v559
    %v561 = vpop.f32.mrb[0].mxu0
    %562 = vmatprep.mubr.bf16.mxu0 0
    %563 = vmatmul.mubr.bf16.gmra.mrb[0].mxu0 %v331
    %v564 = vpop.f32.mrb[0].mxu0
    %v565 = vadd.f32 %v93, %v564
    %v566 = vpop.f32.mrb[0].mxu0
    %v567 = vpop.f32.mrb[0].mxu0
    %v568 = vadd.f32 %v93, %v567
    %v569 = vpop.f32.mrb[0].mxu0
    %570 = vmatprep.mubr.bf16.mxu0 0
    %571 = vmatmul.mubr.bf16.gmra.mrb[0].mxu0 %v334
    %v572 = vpop.f32.mrb[0].mxu0
    %v573 = vadd.f32 %v93, %v572
    %v574 = vpop.f32.mrb[0].mxu0
    %v575 = vpop.f32.mrb[0].mxu0
    %v576 = vadd.f32 %v93, %v575
    %v577 = vpop.f32.mrb[0].mxu0
    %578 = vmatprep.mubr.bf16.mxu0 0
    %579 = vmatmul.mubr.bf16.gmra.mrb[0].mxu0 %v337
    %v580 = vpop.f32.mrb[0].mxu0
    %v581 = vadd.f32 %v93, %v580
    %v582 = vpop.f32.mrb[0].mxu0
    %v583 = vpop.f32.mrb[0].mxu0
    %v584 = vadd.f32 %v93, %v583
    %v585 = vpop.f32.mrb[0].mxu0
    %586 = vmatprep.mubr.bf16.mxu0 0
    %587 = vmatmul.mubr.bf16.gmra.mrb[0].mxu0 %v340
    %v588 = vpop.f32.mrb[0].mxu0
    %v589 = vadd.f32 %v93, %v588
    %v590 = vpop.f32.mrb[0].mxu0
    %v591 = vpop.f32.mrb[0].mxu0
    %v592 = vadd.f32 %v93, %v591
    %v593 = vpop.f32.mrb[0].mxu0
    %594 = vmatprep.mubr.bf16.mxu0 0
    %595 = vmatmul.mubr.bf16.gmra.mrb[0].mxu0 %v343
    %v596 = vpop.f32.mrb[0].mxu0
    %v597 = vadd.f32 %v93, %v596
    %v598 = vpop.f32.mrb[0].mxu0
    %v599 = vpop.f32.mrb[0].mxu0
    %v600 = vadd.f32 %v93, %v599
    %v601 = vpop.f32.mrb[0].mxu0
    %602 = vmatprep.mubr.bf16.mxu0 0
    %603 = vmatmul.mubr.bf16.gmra.mrb[0].mxu0 %v346
    %v604 = vpop.f32.mrb[0].mxu0
    %v605 = vadd.f32 %v93, %v604
    %v606 = vpop.f32.mrb[0].mxu0
    %v607 = vpop.f32.mrb[0].mxu0
    %v608 = vadd.f32 %v93, %v607
    %v609 = vpop.f32.mrb[0].mxu0
    %610 = vmatprep.mubr.bf16.mxu0 0
    %611 = vmatmul.mubr.bf16.gmra.mrb[0].mxu0 %v349
    %v612 = vpop.f32.mrb[0].mxu0
    %v613 = vadd.f32 %v93, %v612
    %v614 = vpop.f32.mrb[0].mxu0
    %v615 = vpop.f32.mrb[0].mxu0
    %v616 = vadd.f32 %v93, %v615
    %v617 = vpop.f32.mrb[0].mxu0
    %618 = vmatprep.mubr.bf16.mxu0 0
    %619 = vmatmul.mubr.bf16.gmra.mrb[0].mxu0 %v352
    %v620 = vpop.f32.mrb[0].mxu0
    %v621 = vadd.f32 %v93, %v620
    %v622 = vpop.f32.mrb[0].mxu0
    %v623 = vpop.f32.mrb[0].mxu0
    %v624 = vadd.f32 %v93, %v623
    %v625 = vpop.f32.mrb[0].mxu0
    %626 = vmatprep.mubr.bf16.mxu0 0
    %627 = vmatmul.mubr.bf16.gmra.mrb[0].mxu0 %v355
    %v628 = vpop.f32.mrb[0].mxu0
    %v629 = vadd.f32 %v93, %v628
    %v630 = vpop.f32.mrb[0].mxu0
    %v631 = vpop.f32.mrb[0].mxu0
    %v632 = vadd.f32 %v93, %v631
    %v633 = vpop.f32.mrb[0].mxu0
    %634 = vmatprep.mubr.bf16.mxu0 0
    %635 = vmatmul.mubr.bf16.gmra.mrb[0].mxu0 %v358
    %v636 = vpop.f32.mrb[0].mxu0
    %v637 = vadd.f32 %v93, %v636
    %v638 = vpop.f32.mrb[0].mxu0
    %v639 = vpop.f32.mrb[0].mxu0
    %v640 = vadd.f32 %v93, %v639
    %v641 = vpop.f32.mrb[0].mxu0
    %642 = vmatprep.mubr.bf16.mxu0 0
    %643 = vmatmul.mubr.bf16.gmra.mrb[0].mxu0 %v361
    %v644 = vpop.f32.mrb[0].mxu0
    %v645 = vadd.f32 %v93, %v644
    %v646 = vpop.f32.mrb[0].mxu0
    %v647 = vpop.f32.mrb[0].mxu0
    %v648 = vadd.f32 %v93, %v647
    %v649 = vpop.f32.mrb[0].mxu0
    %650 = vmatprep.mubr.bf16.mxu0 0
    %651 = vmatmul.mubr.bf16.gmra.mrb[0].mxu0 %v364
    %v652 = vpop.f32.mrb[0].mxu0
    %v653 = vadd.f32 %v93, %v652
    %v654 = vpop.f32.mrb[0].mxu0
    %v655 = vpop.f32.mrb[0].mxu0
    %v656 = vadd.f32 %v93, %v655
    %v657 = vpop.f32.mrb[0].mxu0
    %658 = vdwg.mxu0
    %v659 = vmax.f32 %v405, 0.0
    %v660 = vmax.f32 %v408, 0.0
    %v661 = vmax.f32 %v413, 0.0
    %v662 = vmax.f32 %v416, 0.0
    %v663 = vmax.f32 %v421, 0.0
    %v664 = vmax.f32 %v424, 0.0
    %v665 = vmax.f32 %v429, 0.0
    %v666 = vmax.f32 %v432, 0.0
    %v667 = vmax.f32 %v437, 0.0
    %v668 = vmax.f32 %v440, 0.0
    %v669 = vmax.f32 %v445, 0.0
    %v670 = vmax.f32 %v448, 0.0
    %v671 = vmax.f32 %v453, 0.0
    %v672 = vmax.f32 %v456, 0.0
    %v673 = vmax.f32 %v461, 0.0
    %v674 = vmax.f32 %v464, 0.0
    %v675 = vmax.f32 %v469, 0.0
    %v676 = vmax.f32 %v472, 0.0
    %v677 = vmax.f32 %v477, 0.0
    %v678 = vmax.f32 %v480, 0.0
    %v679 = vmax.f32 %v485, 0.0
    %v680 = vmax.f32 %v488, 0.0
    %v681 = vmax.f32 %v493, 0.0
    %v682 = vmax.f32 %v496, 0.0
    %v683 = vmax.f32 %v501, 0.0
    %v684 = vmax.f32 %v504, 0.0
    %v685 = vmax.f32 %v509, 0.0
    %v686 = vmax.f32 %v512, 0.0
    %v687 = vmax.f32 %v517, 0.0
    %v688 = vmax.f32 %v520, 0.0
    %v689 = vmax.f32 %v525, 0.0
    %v690 = vmax.f32 %v528, 0.0
    %v691 = vmax.f32 %v533, 0.0
    %v692 = vmax.f32 %v536, 0.0
    %v693 = vmax.f32 %v541, 0.0
    %v694 = vmax.f32 %v544, 0.0
    %v695 = vmax.f32 %v549, 0.0
    %v696 = vmax.f32 %v552, 0.0
    %v697 = vmax.f32 %v557, 0.0
    %v698 = vmax.f32 %v560, 0.0
    %v699 = vmax.f32 %v565, 0.0
    %v700 = vmax.f32 %v568, 0.0
    %v701 = vmax.f32 %v573, 0.0
    %v702 = vmax.f32 %v576, 0.0
    %v703 = vmax.f32 %v581, 0.0
    %v704 = vmax.f32 %v584, 0.0
    %v705 = vmax.f32 %v589, 0.0
    %v706 = vmax.f32 %v592, 0.0
    %v707 = vmax.f32 %v597, 0.0
    %v708 = vmax.f32 %v600, 0.0
    %v709 = vmax.f32 %v605, 0.0
    %v710 = vmax.f32 %v608, 0.0
    %v711 = vmax.f32 %v613, 0.0
    %v712 = vmax.f32 %v616, 0.0
    %v713 = vmax.f32 %v621, 0.0
    %v714 = vmax.f32 %v624, 0.0
    %v715 = vmax.f32 %v629, 0.0
    %v716 = vmax.f32 %v632, 0.0
    %v717 = vmax.f32 %v637, 0.0
    %v718 = vmax.f32 %v640, 0.0
    %v719 = vmax.f32 %v645, 0.0
    %v720 = vmax.f32 %v648, 0.0
    %v721 = vmax.f32 %v653, 0.0
    %v722 = vmax.f32 %v656, 0.0
    %vm723 = vcmask 523264
    %v724 = vsel %vm723, %v659, 0.0
    %v725 = vsel %vm723, %v660, 0.0
    %v726 = vadd.f32 %v724, %v725
    %v727 = vsel %vm723, %v661, 0.0
    %v728 = vadd.f32 %v726, %v727
    %v729 = vsel %vm723, %v662, 0.0
    %v730 = vadd.f32 %v728, %v729
    %v731 = vsel %vm723, %v663, 0.0
    %v732 = vadd.f32 %v730, %v731
    %v733 = vsel %vm723, %v664, 0.0
    %v734 = vadd.f32 %v732, %v733
    %v735 = vsel %vm723, %v665, 0.0
    %v736 = vadd.f32 %v734, %v735
    %v737 = vsel %vm723, %v666, 0.0
    %v738 = vadd.f32 %v736, %v737
    %v739 = vsel %vm723, %v667, 0.0
    %v740 = vadd.f32 %v738, %v739
    %v741 = vsel %vm723, %v668, 0.0
    %v742 = vadd.f32 %v740, %v741
    %v743 = vsel %vm723, %v669, 0.0
    %v744 = vadd.f32 %v742, %v743
    %v745 = vsel %vm723, %v670, 0.0
    %v746 = vadd.f32 %v744, %v745
    %v747 = vsel %vm723, %v671, 0.0
    %v748 = vadd.f32 %v746, %v747
    %v749 = vsel %vm723, %v672, 0.0
    %v750 = vadd.f32 %v748, %v749
    %v751 = vsel %vm723, %v673, 0.0
    %v752 = vadd.f32 %v750, %v751
    %v753 = vsel %vm723, %v674, 0.0
    %v754 = vadd.f32 %v752, %v753
    %v755 = vsel %vm723, %v675, 0.0
    %v756 = vadd.f32 %v754, %v755
    %v757 = vsel %vm723, %v676, 0.0
    %v758 = vadd.f32 %v756, %v757
    %v759 = vsel %vm723, %v677, 0.0
    %v760 = vadd.f32 %v758, %v759
    %v761 = vsel %vm723, %v678, 0.0
    %v762 = vadd.f32 %v760, %v761
    %v763 = vsel %vm723, %v679, 0.0
    %v764 = vadd.f32 %v762, %v763
    %v765 = vsel %vm723, %v680, 0.0
    %v766 = vadd.f32 %v764, %v765
    %v767 = vsel %vm723, %v681, 0.0
    %v768 = vadd.f32 %v766, %v767
    %v769 = vsel %vm723, %v682, 0.0
    %v770 = vadd.f32 %v768, %v769
    %v771 = vsel %vm723, %v683, 0.0
    %v772 = vadd.f32 %v770, %v771
    %v773 = vsel %vm723, %v684, 0.0
    %v774 = vadd.f32 %v772, %v773
    %v775 = vsel %vm723, %v685, 0.0
    %v776 = vadd.f32 %v774, %v775
    %v777 = vsel %vm723, %v686, 0.0
    %v778 = vadd.f32 %v776, %v777
    %v779 = vsel %vm723, %v687, 0.0
    %v780 = vadd.f32 %v778, %v779
    %v781 = vsel %vm723, %v688, 0.0
    %v782 = vadd.f32 %v780, %v781
    %v783 = vsel %vm723, %v689, 0.0
    %v784 = vadd.f32 %v782, %v783
    %v785 = vsel %vm723, %v690, 0.0
    %v786 = vadd.f32 %v784, %v785
    %v787 = vrot.slane %v786, 4
    %v788 = vadd.f32 %v786, %v787
    %v789 = vrot.slane %v788, 2
    %v790 = vadd.f32 %v788, %v789
    %v791 = vrot.slane %v790, 1
    %v792 = vadd.f32 %v790, %v791
    %v793 = vsel %vm723, %v691, 0.0
    %v794 = vsel %vm723, %v692, 0.0
    %v795 = vadd.f32 %v793, %v794
    %v796 = vsel %vm723, %v693, 0.0
    %v797 = vadd.f32 %v795, %v796
    %v798 = vsel %vm723, %v694, 0.0
    %v799 = vadd.f32 %v797, %v798
    %v800 = vsel %vm723, %v695, 0.0
    %v801 = vadd.f32 %v799, %v800
    %v802 = vsel %vm723, %v696, 0.0
    %v803 = vadd.f32 %v801, %v802
    %v804 = vsel %vm723, %v697, 0.0
    %v805 = vadd.f32 %v803, %v804
    %v806 = vsel %vm723, %v698, 0.0
    %v807 = vadd.f32 %v805, %v806
    %v808 = vsel %vm723, %v699, 0.0
    %v809 = vadd.f32 %v807, %v808
    %v810 = vsel %vm723, %v700, 0.0
    %v811 = vadd.f32 %v809, %v810
    %v812 = vsel %vm723, %v701, 0.0
    %v813 = vadd.f32 %v811, %v812
    %v814 = vsel %vm723, %v702, 0.0
    %v815 = vadd.f32 %v813, %v814
    %v816 = vsel %vm723, %v703, 0.0
    %v817 = vadd.f32 %v815, %v816
    %v818 = vsel %vm723, %v704, 0.0
    %v819 = vadd.f32 %v817, %v818
    %v820 = vsel %vm723, %v705, 0.0
    %v821 = vadd.f32 %v819, %v820
    %v822 = vsel %vm723, %v706, 0.0
    %v823 = vadd.f32 %v821, %v822
    %v824 = vsel %vm723, %v707, 0.0
    %v825 = vadd.f32 %v823, %v824
    %v826 = vsel %vm723, %v708, 0.0
    %v827 = vadd.f32 %v825, %v826
    %v828 = vsel %vm723, %v709, 0.0
    %v829 = vadd.f32 %v827, %v828
    %v830 = vsel %vm723, %v710, 0.0
    %v831 = vadd.f32 %v829, %v830
    %v832 = vsel %vm723, %v711, 0.0
    %v833 = vadd.f32 %v831, %v832
    %v834 = vsel %vm723, %v712, 0.0
    %v835 = vadd.f32 %v833, %v834
    %v836 = vsel %vm723, %v713, 0.0
    %v837 = vadd.f32 %v835, %v836
    %v838 = vsel %vm723, %v714, 0.0
    %v839 = vadd.f32 %v837, %v838
    %v840 = vsel %vm723, %v715, 0.0
    %v841 = vadd.f32 %v839, %v840
    %v842 = vsel %vm723, %v716, 0.0
    %v843 = vadd.f32 %v841, %v842
    %v844 = vsel %vm723, %v717, 0.0
    %v845 = vadd.f32 %v843, %v844
    %v846 = vsel %vm723, %v718, 0.0
    %v847 = vadd.f32 %v845, %v846
    %v848 = vsel %vm723, %v719, 0.0
    %v849 = vadd.f32 %v847, %v848
    %v850 = vsel %vm723, %v720, 0.0
    %v851 = vadd.f32 %v849, %v850
    %v852 = vsel %vm723, %v721, 0.0
    %v853 = vadd.f32 %v851, %v852
    %v854 = vsel %vm723, %v722, 0.0
    %v855 = vadd.f32 %v853, %v854
    %v856 = vrot.slane %v855, 4
    %v857 = vadd.f32 %v855, %v856
    %v858 = vrot.slane %v857, 2
    %v859 = vadd.f32 %v857, %v858
    %v860 = vrot.slane %v859, 1
    %v861 = vadd.f32 %v859, %v860
    %v862 = vrcp.pop 256.0
    %v863 = vmul.f32 %v792, %v862
    %v864 = vmul.f32 %v861, %v862
    %v866 = vrot.slane %v20, 1
    %v869 = vadd.f32 %v863, %v20
    %v870 = vadd.f32 %v864, %v866
    %v871 = vld [vmem:[%s2] sm:$0xff]
    %v872 = vld [vmem:[%s2 + $0x10] sm:$0xff]
    %v873 = vld [vmem:[%s2 + $0x20] sm:$0xff]
    %v874 = vld [vmem:[%s2 + $0x30] sm:$0xff]
    %v875 = vld [vmem:[%s2 + $0x40] sm:$0xff]
    %v876 = vld [vmem:[%s2 + $0x50] sm:$0xff]
    %v877 = vld [vmem:[%s2 + $0x60] sm:$0xff]
    %v878 = vld [vmem:[%s2 + $0x70] sm:$0xff]
    %v879 = vlaneseq
    %v880 = vshrl.u32 %v879, 7
    %v881 = vsub.s32 1, %v880
    %v882 = vrot.slane %v19, %v881
    %v885 = vrot.slane %v870, 7
    %vm886 = vcmask 1041409
    %v887 = vsel %vm886, %v885, %v869
    %v888 = vsel %vm723, %v887, 0
    %890 = vmatprep.subr.mxu0 0.0
    %891 = vmatpush1.msra.mxu0 %v871
    %892 = vmatprep.subr.mxu0 0.0
    %893 = vmatpush1.msra.mxu0 %v872
    %894 = vmatprep.subr.mxu0 0.0
    %895 = vmatpush1.msra.mxu0 %v873
    %896 = vmatprep.subr.mxu0 0.0
    %897 = vmatpush1.msra.mxu0 %v874
    %898 = vmatprep.subr.mxu0 0.0
    %899 = vmatpush1.msra.mxu0 %v875
    %900 = vmatprep.subr.mxu0 0.0
    %901 = vmatpush1.msra.mxu0 %v876
    %902 = vmatprep.subr.mxu0 0.0
    %903 = vmatpush1.msra.mxu0 %v877
    %904 = vmatprep.subr.mxu0 0.0
    %905 = vmatpush1.msra.mxu0 %v878
    %906 = vmatprep.subr.mxu0 0.0
    %907 = vmatpush1.msra.mxu0 0.0
    %908 = vmatprep.subr.mxu0 0.0
    %909 = vmatpush1.msra.mxu0 0.0
    %910 = vmatprep.subr.mxu0 0.0
    %911 = vmatpush1.msra.mxu0 0.0
    %912 = vmatprep.subr.mxu0 0.0
    %913 = vmatpush1.msra.mxu0 0.0
    %914 = vmatprep.subr.mxu0 0.0
    %915 = vmatpush1.msra.mxu0 0.0
    %916 = vmatprep.subr.mxu0 0.0
    %917 = vmatpush1.msra.mxu0 0.0
    %918 = vmatprep.subr.mxu0 0.0
    %919 = vmatpush1.msra.mxu0 0.0
    %920 = vmatprep.subr.mxu0 0.0
    %921 = vmatpush1.msra.mxu0 0.0
    %922 = vmatprep.subr.mxu0 0.0
    %923 = vmatpush1.msra.mxu0 0.0
    %924 = vmatprep.subr.mxu0 0.0
    %925 = vmatpush1.msra.mxu0 0.0
    %926 = vmatprep.subr.mxu0 0.0
    %927 = vmatpush1.msra.mxu0 0.0
    %928 = vmatprep.subr.mxu0 0.0
    %929 = vmatpush1.msra.mxu0 0.0
    %930 = vmatprep.subr.mxu0 0.0
    %931 = vmatpush1.msra.mxu0 0.0
    %932 = vmatprep.subr.mxu0 0.0
    %933 = vmatpush1.msra.mxu0 0.0
    %934 = vmatprep.subr.mxu0 0.0
    %935 = vmatpush1.msra.mxu0 0.0
    %936 = vmatprep.subr.mxu0 0.0
    %937 = vmatpush1.msra.mxu0 0.0
    %938 = vmatprep.subr.mxu0 0.0
    %939 = vmatpush1.msra.mxu0 0.0
    %940 = vmatprep.subr.mxu0 0.0
    %941 = vmatpush1.msra.mxu0 0.0
    %942 = vmatprep.subr.mxu0 0.0
    %943 = vmatpush1.msra.mxu0 0.0
    %944 = vmatprep.subr.mxu0 0.0
    %945 = vmatpush1.msra.mxu0 0.0
    %946 = vmatprep.subr.mxu0 0.0
    %947 = vmatpush1.msra.mxu0 0.0
    %948 = vmatprep.subr.mxu0 0.0
    %949 = vmatpush1.msra.mxu0 0.0
    %950 = vmatprep.subr.mxu0 0.0
    %951 = vmatpush1.msra.mxu0 0.0
    %952 = vmatprep.subr.mxu0 0.0
    %953 = vmatpush1.msra.mxu0 0.0
    %954 = vmatprep.mubr.f32.mxu0 0.0
    %955 = vmatmul.mubr.f32.gmra.mrb[0].mxu0 %v888
    %v956 = vpop.f32.mrb[0].mxu0
    %v957 = vadd.f32 %v882, %v956
    %v958 = vpop.f32.mrb[0].mxu0
    %959 = vdwg.mxu0
    %vm960 = vcmask 517120
    %v961 = vsel %vm960, %v957, 0.0
    %962 = vadd.xlane.f32.xlu0 %v961
    %v963 = vpop.xlane.xlu0 %962
    %v964 = vrcp.pop 64.0
    %v965 = vmul.f32 %v963, %v964
    %v966 = vsub.f32 %v957, %v965
    %v967 = vmul.f32 %v966, %v966
    %v968 = vsel %vm960, %v967, 0.0
    %969 = vadd.xlane.f32.xlu0 %v968
    %v970 = vpop.xlane.xlu0 %969
    %v971 = vmul.f32 %v970, %v964
    %v972 = vadd.f32 %v971, 1e-05
    %v973 = vrsqrt.pop %v972
    %v974 = vmul.f32 %v966, %v973
    %v975 = vlaneseq
    %v976 = vshrl.u32 %v975, 7
    %v977 = vsub.s32 2, %v976
    %v978 = vrot.slane %v19, %v977
    %v979 = vmul.f32 %v974, %v978
    %v980 = vlaneseq
    %v981 = vshrl.u32 %v980, 7
    %v982 = vsub.s32 3, %v981
    %v983 = vrot.slane %v19, %v982
    %v984 = vadd.f32 %v979, %v983
    %v986 = vadd.f32 %v984, %v887
    %v987 = vld [vmem:[%s2 + $0x8] sm:$0xff]
    %v988 = vld [vmem:[%s2 + $0x18] sm:$0xff]
    %v989 = vld [vmem:[%s2 + $0x28] sm:$0xff]
    %v990 = vld [vmem:[%s2 + $0x38] sm:$0xff]
    %v991 = vld [vmem:[%s2 + $0x48] sm:$0xff]
    %v992 = vld [vmem:[%s2 + $0x58] sm:$0xff]
    %v993 = vld [vmem:[%s2 + $0x68] sm:$0xff]
    %v994 = vld [vmem:[%s2 + $0x78] sm:$0xff]
    %v995 = vlaneseq
    %v996 = vshrl.u32 %v995, 7
    %v997 = vsub.s32 4, %v996
    %v998 = vrot.slane %v19, %v997
    %v1000 = vsel %vm723, %v986, 0
    %1002 = vmatprep.subr.mxu0 0.0
    %1003 = vmatpush1.msra.mxu0 %v987
    %1004 = vmatprep.subr.mxu0 0.0
    %1005 = vmatpush1.msra.mxu0 %v988
    %1006 = vmatprep.subr.mxu0 0.0
    %1007 = vmatpush1.msra.mxu0 %v989
    %1008 = vmatprep.subr.mxu0 0.0
    %1009 = vmatpush1.msra.mxu0 %v990
    %1010 = vmatprep.subr.mxu0 0.0
    %1011 = vmatpush1.msra.mxu0 %v991
    %1012 = vmatprep.subr.mxu0 0.0
    %1013 = vmatpush1.msra.mxu0 %v992
    %1014 = vmatprep.subr.mxu0 0.0
    %1015 = vmatpush1.msra.mxu0 %v993
    %1016 = vmatprep.subr.mxu0 0.0
    %1017 = vmatpush1.msra.mxu0 %v994
    %1018 = vmatprep.subr.mxu0 0.0
    %1019 = vmatpush1.msra.mxu0 0.0
    %1020 = vmatprep.subr.mxu0 0.0
    %1021 = vmatpush1.msra.mxu0 0.0
    %1022 = vmatprep.subr.mxu0 0.0
    %1023 = vmatpush1.msra.mxu0 0.0
    %1024 = vmatprep.subr.mxu0 0.0
    %1025 = vmatpush1.msra.mxu0 0.0
    %1026 = vmatprep.subr.mxu0 0.0
    %1027 = vmatpush1.msra.mxu0 0.0
    %1028 = vmatprep.subr.mxu0 0.0
    %1029 = vmatpush1.msra.mxu0 0.0
    %1030 = vmatprep.subr.mxu0 0.0
    %1031 = vmatpush1.msra.mxu0 0.0
    %1032 = vmatprep.subr.mxu0 0.0
    %1033 = vmatpush1.msra.mxu0 0.0
    %1034 = vmatprep.subr.mxu0 0.0
    %1035 = vmatpush1.msra.mxu0 0.0
    %1036 = vmatprep.subr.mxu0 0.0
    %1037 = vmatpush1.msra.mxu0 0.0
    %1038 = vmatprep.subr.mxu0 0.0
    %1039 = vmatpush1.msra.mxu0 0.0
    %1040 = vmatprep.subr.mxu0 0.0
    %1041 = vmatpush1.msra.mxu0 0.0
    %1042 = vmatprep.subr.mxu0 0.0
    %1043 = vmatpush1.msra.mxu0 0.0
    %1044 = vmatprep.subr.mxu0 0.0
    %1045 = vmatpush1.msra.mxu0 0.0
    %1046 = vmatprep.subr.mxu0 0.0
    %1047 = vmatpush1.msra.mxu0 0.0
    %1048 = vmatprep.subr.mxu0 0.0
    %1049 = vmatpush1.msra.mxu0 0.0
    %1050 = vmatprep.subr.mxu0 0.0
    %1051 = vmatpush1.msra.mxu0 0.0
    %1052 = vmatprep.subr.mxu0 0.0
    %1053 = vmatpush1.msra.mxu0 0.0
    %1054 = vmatprep.subr.mxu0 0.0
    %1055 = vmatpush1.msra.mxu0 0.0
    %1056 = vmatprep.subr.mxu0 0.0
    %1057 = vmatpush1.msra.mxu0 0.0
    %1058 = vmatprep.subr.mxu0 0.0
    %1059 = vmatpush1.msra.mxu0 0.0
    %1060 = vmatprep.subr.mxu0 0.0
    %1061 = vmatpush1.msra.mxu0 0.0
    %1062 = vmatprep.subr.mxu0 0.0
    %1063 = vmatpush1.msra.mxu0 0.0
    %1064 = vmatprep.subr.mxu0 0.0
    %1065 = vmatpush1.msra.mxu0 0.0
    %1066 = vmatprep.mubr.f32.mxu0 0.0
    %1067 = vmatmul.mubr.f32.gmra.mrb[0].mxu0 %v1000
    %v1068 = vpop.f32.mrb[0].mxu0
    %v1069 = vadd.f32 %v998, %v1068
    %v1070 = vpop.f32.mrb[0].mxu0
    %1071 = vdwg.mxu0
    %1072 = vst [vmem:[#allocation2] sm:$0x3] %v1069
    // Predicated region
    $region18: #{seq_trans_forward.1} parent=1 // pred_check
      _
    $region19: #{seq_trans_forward.1} parent=1 // pred_check_branch
      %1074 = sbr.rel (0) target = $region21
    $region20: #{seq_trans_forward.1} parent=1 // pred_region
      %s1076 = ssub.s32 32, 32
      %1077 = vsyncadd [#allocation3], %s1076
      %s1079 = sshll.u32 [#allocation2], 4
      %s1080 = int_to_ptr.vmem [resolvable:$true] %s1079
      %1082 = dma.vmem_to_hbm [thread:$0]  %s1080, 32, %s4, [#allocation3]
    $region21: #{seq_trans_forward.1} parent=1 // pred_fallthru
      _
    // Predicated region
    $region22: #{seq_trans_forward.1} parent=1 // pred_check
      _
    $region23: #{seq_trans_forward.1} parent=1 // pred_check_branch
      %1084 = sbr.rel (0) target = $region25
    $region24: #{seq_trans_forward.1} parent=1 // pred_region
      %1085 = dma.done [#allocation3], 32
    $region25: #{seq_trans_forward.1} parent=1 // pred_fallthru
      _
    %1086 = vsyncpa [#allocation3], 1

</llo_original>
